<compile_context>
chip_gen: v7x
topology: tpu7x:2x2x1
jax: 0.10.0
libtpu: 0.0.40
codegen_flags: <defaults>
</compile_context>

<pallas_src>
import functools
import math

import jax
import jax.numpy as jnp
from jax import lax
from jax.experimental import pallas as pl
from jax.experimental.pallas import tpu as pltpu
import numpy as np

_LANE = 128
_SAFE_WORKSET = 40 << 20   # target bound for 2*in + scratch + 2*out (fits v7x)


# ---------------------------------------------------------------------------
# Sizing helpers
# ---------------------------------------------------------------------------
def _sub_mult(dtype) -> int:
    return {4: 8, 2: 16, 1: 32}.get(jnp.dtype(dtype).itemsize, 8)


def _round_up(x: int, m: int) -> int:
    return ((x + m - 1) // m) * m


def _block_budget_bytes(itemsize: int) -> int:
    """Per-input-block byte budget.  Bigger on v7x (3.2 TB/s needs larger blocks to
    amortize the ~0.35us/step overhead), scaled by dtype so 2x input double-buffers
    plus the f32 block accumulator stay inside the safe working-set bound."""
    try:
        vmem_phys = int(getattr(pltpu.get_tpu_info(), "vmem_capacity_bytes", 128 << 20))
    except Exception:  # non-TPU tracing fallback
        vmem_phys = 128 << 20
    base = (10 << 20) if vmem_phys <= (64 << 20) else (8 << 20)
    dtype_cap = (_SAFE_WORKSET * itemsize) // (2 * itemsize + 4)
    return max(2 << 20, min(base, dtype_cap))


def _pick_tile(n: int, mult: int, cap: int):
    """Tile size along an axis of extent n -> (tile, ragged).

    Full extent when n <= cap (always a legal block); otherwise prefer the largest
    divisor of n that is a multiple of `mult` and <= cap; if none exists return a
    cap-sized multiple of `mult` with ragged=True (caller uses a pl.cdiv grid and,
    on reduction axes, masks the overhang in-kernel)."""
    if n <= cap:
        return n, False
    t = max(mult, (cap // mult) * mult)
    d = t
    while d >= mult:
        if n % d == 0:
            return d, False
        d -= mult
    return t, True


def _vmem_block_bytes(block_shape, dtype) -> int:
    """VMEM footprint of one buffered block, accounting for (sublane, lane) padding."""
    itemsize = jnp.dtype(dtype).itemsize
    dims = list(block_shape)
    if dims:
        dims[-1] = _round_up(dims[-1], _LANE)
    if len(dims) >= 2:
        dims[-2] = _round_up(dims[-2], _sub_mult(dtype))
    return math.prod(dims) * itemsize


def _compiler_params(semantics, vmem_needed):
    kwargs = {"dimension_semantics": semantics}
    needed = vmem_needed + (2 << 20)           # headroom
    if needed > (16 << 20):                    # above the smallest (v5e) default scoped VMEM
        kwargs["vmem_limit_bytes"] = int(min(_round_up(needed, 1 << 20), 48 << 20))
    return pltpu.CompilerParams(**kwargs)


# ---------------------------------------------------------------------------
# Kernels: elementwise f32 block accumulation in the hot loop; reduce + scale
# + cast once in the epilogue.
# ---------------------------------------------------------------------------
def _mean_last_kernel(x_ref, o_ref, *acc, r, rt, inv_r, mask_r):
    """x block (pt, rt): reduce along lanes; grid axis 1 walks the reduction."""
    k = pl.program_id(1)
    x = x_ref[...].astype(jnp.float32)
    if mask_r:
        lane = lax.broadcasted_iota(jnp.int32, x.shape, 1)
        x = jnp.where(k * rt + lane < r, x, 0.0)

    if not acc:  # single reduction step: reduce directly, no accumulator
        o_ref[...] = (jnp.sum(x, axis=1, keepdims=True) * inv_r).astype(o_ref.dtype)
        return
    acc_ref, = acc

    @pl.when(k == 0)
    def _():
        acc_ref[...] = jnp.zeros_like(acc_ref)

    acc_ref[...] += x                                          # pure VPU

    @pl.when(k == pl.num_programs(1) - 1)
    def _():
        o_ref[...] = (jnp.sum(acc_ref[...], axis=1, keepdims=True) * inv_r
                      ).astype(o_ref.dtype)


def _mean_mid_kernel(x_ref, o_ref, *acc, r, rt, inv_r, mask_r):
    """x block (pt, rt, qt): reduce the middle axis; grid axis 2 walks the reduction."""
    k = pl.program_id(2)
    x = x_ref[...].astype(jnp.float32)
    if mask_r:
        row = lax.broadcasted_iota(jnp.int32, x.shape, 1)
        x = jnp.where(k * rt + row < r, x, 0.0)

    if not acc:
        o_ref[...] = (jnp.sum(x, axis=1, keepdims=True) * inv_r).astype(o_ref.dtype)
        return
    acc_ref, = acc

    @pl.when(k == 0)
    def _():
        acc_ref[...] = jnp.zeros_like(acc_ref)

    acc_ref[...] += x                                          # pure VPU

    @pl.when(k == pl.num_programs(2) - 1)
    def _():
        o_ref[...] = (jnp.sum(acc_ref[...], axis=1, keepdims=True) * inv_r
                      ).astype(o_ref.dtype)


def _mean_all_kernel(x_ref, o_ref, *acc, rows, cols, rt, ct, steps, total_rb,
                     mask_rows, mask_cols, guard_tail):
    """Full reduction.  Grid (G, steps, col_blocks): G row-block groups ("parallel",
    feeds both v7x TensorCores); each group emits one f32 partial sum."""
    g = pl.program_id(0)
    k = pl.program_id(1)
    j = pl.program_id(2)
    rb = g * steps + k                       # logical row-block id (unclamped)

    x = x_ref[...].astype(jnp.float32)
    mask = None
    if mask_rows:
        ri = lax.broadcasted_iota(jnp.int32, x.shape, 0)
        mask = rb * rt + ri < rows
    if mask_cols:
        ci = lax.broadcasted_iota(jnp.int32, x.shape, 1)
        mc = j * ct + ci < cols
        mask = mc if mask is None else jnp.logical_and(mask, mc)
    if mask is not None:
        x = jnp.where(mask, x, 0.0)

    if not acc:  # single block for this group
        o_ref[...] = jnp.sum(x, keepdims=True)
        return
    acc_ref, = acc

    @pl.when(jnp.logical_and(k == 0, j == 0))
    def _():
        acc_ref[...] = jnp.zeros_like(acc_ref)

    def _accum():
        acc_ref[...] += x                                      # pure VPU

    if guard_tail:
        pl.when(rb < total_rb)(_accum)       # skip the clamped duplicate tail block
    else:
        _accum()

    @pl.when(jnp.logical_and(k == pl.num_programs(1) - 1,
                             j == pl.num_programs(2) - 1))
    def _():
        o_ref[...] = jnp.sum(acc_ref[...], keepdims=True)


# ---------------------------------------------------------------------------
# pallas_call wrappers
# ---------------------------------------------------------------------------
def _mean_last_axis(x2d, out_dtype):
    """x2d: (P, R) -> (P, 1) mean over the last (lane) axis."""
    p, r = x2d.shape
    dtype = x2d.dtype
    item, sub = jnp.dtype(dtype).itemsize, _sub_mult(dtype)
    o_item = jnp.dtype(out_dtype).itemsize
    budget = _block_budget_bytes(item)

    rt, _ = _pick_tile(r, _LANE, max(_LANE, budget // (item * sub)))
    rt_lane = _round_up(rt, _LANE)
    multi = pl.cdiv(r, rt) > 1
    per_row = (2 * rt_lane * item + (4 * rt_lane if multi else 0)
               + 2 * _LANE * o_item)
    pt, _ = _pick_tile(p, sub, max(sub, _SAFE_WORKSET // per_row))

    mask_r = (r % rt) != 0
    grid = (pl.cdiv(p, pt), pl.cdiv(r, rt))

    scratch, scratch_bytes = [], 0
    if multi:
        scratch = [pltpu.VMEM((pt, rt), jnp.float32)]
        scratch_bytes = _vmem_block_bytes((pt, rt), jnp.float32)
    vmem_needed = (2 * _vmem_block_bytes((pt, rt), dtype)
                   + 2 * _vmem_block_bytes((pt, 1), out_dtype) + scratch_bytes)

    kernel = functools.partial(_mean_last_kernel, r=r, rt=rt, inv_r=1.0 / r,
                               mask_r=mask_r)
    return pl.pallas_call(
        kernel,
        out_shape=jax.ShapeDtypeStruct((p, 1), out_dtype),
        grid=grid,
        in_specs=[pl.BlockSpec((pt, rt), lambda i, k: (i, k))],
        out_specs=pl.BlockSpec((pt, 1), lambda i, k: (i, 0)),
        scratch_shapes=scratch,
        compiler_params=_compiler_params(("parallel", "arbitrary"), vmem_needed),
    )(x2d)


def _mean_mid_axis(x3d, out_dtype):
    """x3d: (P, R, Q) -> (P, 1, Q) mean over the middle axis (no transpose)."""
    p, r, q = x3d.shape
    dtype = x3d.dtype
    item, sub = jnp.dtype(dtype).itemsize, _sub_mult(dtype)
    o_item, o_sub = jnp.dtype(out_dtype).itemsize, _sub_mult(out_dtype)
    budget = _block_budget_bytes(item)

    # Lane tile: bounded by the input budget AND by the (sublane-padded) output
    # double-buffers so tiny-R / huge-Q shapes cannot blow VMEM.
    qt_cap = max(_LANE, min(budget // (item * sub), budget // (2 * o_sub * o_item)))
    qt, _ = _pick_tile(q, _LANE, qt_cap)
    qt_lane = _round_up(qt, _LANE)
    rt, _ = _pick_tile(r, sub, max(sub, budget // (item * qt_lane)))
    multi = pl.cdiv(r, rt) > 1
    per_slice = (2 * _round_up(rt, sub) * qt_lane * item
                 + (4 * _round_up(rt, 8) * qt_lane if multi else 0)
                 + 2 * o_sub * qt_lane * o_item)
    pt, _ = _pick_tile(p, 1, max(1, _SAFE_WORKSET // per_slice))

    mask_r = (r % rt) != 0
    grid = (pl.cdiv(p, pt), pl.cdiv(q, qt), pl.cdiv(r, rt))

    scratch, scratch_bytes = [], 0
    if multi:
        scratch = [pltpu.VMEM((pt, rt, qt), jnp.float32)]
        scratch_bytes = _vmem_block_bytes((pt, rt, qt), jnp.float32)
    vmem_needed = (2 * _vmem_block_bytes((pt, rt, qt), dtype)
                   + 2 * _vmem_block_bytes((pt, 1, qt), out_dtype) + scratch_bytes)

    kernel = functools.partial(_mean_mid_kernel, r=r, rt=rt, inv_r=1.0 / r,
                               mask_r=mask_r)
    return pl.pallas_call(
        kernel,
        out_shape=jax.ShapeDtypeStruct((p, 1, q), out_dtype),
        grid=grid,
        in_specs=[pl.BlockSpec((pt, rt, qt), lambda i, j, k: (i, k, j))],
        out_specs=pl.BlockSpec((pt, 1, qt), lambda i, j, k: (i, 0, j)),
        scratch_shapes=scratch,
        compiler_params=_compiler_params(("parallel", "parallel", "arbitrary"),
                                         vmem_needed),
    )(x3d)


def _mean_all(x, out_dtype):
    """Mean over every element -> 0-d array of out_dtype."""
    n = x.size
    dtype = x.dtype
    item, sub = jnp.dtype(dtype).itemsize, _sub_mult(dtype)
    budget = _block_budget_bytes(item)

    # Lane-dense 2-D view via pure reshape (no transpose / padding copy).
    cols = None
    for cand in (2048, 1024, 512, 256, 128):
        if n % cand == 0:
            cols = cand
            break
    if cols is None:
        # Exact reshape fallback (grouping dims), still one HBM pass.
        # TODO(synk): a 1-D prime-length tensor stays a (1, n) single-row slab -> below peak BW.
        cols = x.shape[-1] if x.ndim >= 2 else n
    rows = n // cols
    x2d = x.reshape(rows, cols)

    ct, c_ragged = _pick_tile(cols, _LANE, max(_LANE, budget // (item * sub)))
    ct_lane = _round_up(ct, _LANE)
    rt, r_ragged = _pick_tile(rows, sub, max(sub, budget // (item * ct_lane)))

    total_rb = pl.cdiv(rows, rt)
    col_blocks = pl.cdiv(cols, ct)
    # Megacore: split row blocks over a leading "parallel" axis (2 TCs on v7x).
    G = 2 if total_rb >= 8 else 1
    steps = pl.cdiv(total_rb, G)
    guard_tail = (G * steps != total_rb)
    grid = (G, steps, col_blocks)

    single = (steps * col_blocks == 1)
    scratch, scratch_bytes = [], 0
    if not single:
        scratch = [pltpu.VMEM((rt, ct), jnp.float32)]
        scratch_bytes = _vmem_block_bytes((rt, ct), jnp.float32)
    vmem_needed = (2 * _vmem_block_bytes((rt, ct), dtype)
                   + 2 * _vmem_block_bytes((1, 1), jnp.float32) + scratch_bytes)

    kernel = functools.partial(
        _mean_all_kernel, rows=rows, cols=cols, rt=rt, ct=ct, steps=steps,
        total_rb=total_rb, mask_rows=r_ragged, mask_cols=c_ragged,
        guard_tail=guard_tail)

    partials = pl.pallas_call(
        kernel,
        out_shape=jax.ShapeDtypeStruct((G, 1), jnp.float32),
        grid=grid,
        in_specs=[pl.BlockSpec(
            (rt, ct),
            lambda g, k, j: (jnp.minimum(g * steps + k, total_rb - 1), j))],
        out_specs=pl.BlockSpec((1, 1), lambda g, k, j: (g, 0)),
        scratch_shapes=scratch,
        compiler_params=_compiler_params(("parallel", "arbitrary", "arbitrary"),
                                         vmem_needed),
    )(x2d)
    # Tiny (G, 1) combine + scale + cast outside the kernel (G <= 2).
    return (jnp.sum(partials) * (1.0 / n)).astype(out_dtype)


# ---------------------------------------------------------------------------
# Public entry point: torchwrench Mean.forward equivalent
# ---------------------------------------------------------------------------
def pallas_mean(x, dim=None, keepdim=False, dtype=None):
    out_dtype = jnp.dtype(dtype) if dtype is not None else x.dtype

    if dim is None:
        res = _mean_all(x, out_dtype)
        if keepdim:
            # torch>=2.0: mean(dim=None, keepdim=True) keeps every dim as size 1.
            # TODO(synk): torch<2.0 Mean broadcast the scalar to x.shape instead.
            return jnp.full((1,) * x.ndim, res, dtype=out_dtype)
        return res

    # TODO(synk): tuple-of-dims reduction (torch.mean accepts it) is not supported here.
    ax = dim if dim >= 0 else dim + x.ndim
    if not (0 <= ax < x.ndim):
        raise ValueError(f"invalid dim {dim} for ndim {x.ndim}")

    pre, r, post = x.shape[:ax], x.shape[ax], x.shape[ax + 1:]
    p, q = math.prod(pre), math.prod(post)

    if ax == x.ndim - 1:
        out = _mean_last_axis(x.reshape(p, r), out_dtype)       # (P, 1)
    else:
        out = _mean_mid_axis(x.reshape(p, r, q), out_dtype)     # (P, 1, Q)

    return out.reshape(pre + (1,) + post) if keepdim else out.reshape(pre + post)


# ---------------------------------------------------------------------------
# Demo / self-test
# ---------------------------------------------------------------------------
if __name__ == "__main__":
    key = jax.random.PRNGKey(0)
    x = jax.random.normal(key, (2, 4, 16, 16), dtype=jnp.float32)  # NCHW-like

    # Case 1: Mean(dim=1) — channel mean (middle-axis path, pt>1 leading block).
    y1 = jax.block_until_ready(pallas_mean(x, dim=1, keepdim=False))
    ref1 = jnp.mean(x, axis=1)
    assert y1.shape == ref1.shape
    np.testing.assert_allclose(np.asarray(y1), np.asarray(ref1), rtol=1e-5, atol=1e-5)

    # Case 2: Mean(dim=-1, keepdim=True, dtype=bfloat16) — lane-reduction path + cast.
    y2 = jax.block_until_ready(pallas_mean(x, dim=-1, keepdim=True, dtype=jnp.bfloat16))
    ref2 = jnp.mean(x, axis=-1, keepdims=True).astype(jnp.bfloat16)
    assert y2.shape == ref2.shape and y2.dtype == jnp.dtype(jnp.bfloat16)
    np.testing.assert_allclose(np.asarray(y2, dtype=np.float32),
                               np.asarray(ref2, dtype=np.float32), rtol=2e-2, atol=2e-2)

    # Case 3: Mean() — global mean, scalar result.
    y3 = jax.block_until_ready(pallas_mean(x))
    ref3 = jnp.mean(x)
    assert y3.shape == ()
    np.testing.assert_allclose(np.asarray(y3), np.asarray(ref3), rtol=1e-5, atol=1e-5)

    # Case 4: leading-axis reduction (dim=0) on a bigger 2-D tensor.
    xb = jax.random.normal(jax.random.PRNGKey(1), (2048, 256), dtype=jnp.float32)
    y4 = jax.block_until_ready(pallas_mean(xb, dim=0))
    ref4 = jnp.mean(xb, axis=0)
    assert y4.shape == ref4.shape
    np.testing.assert_allclose(np.asarray(y4), np.asarray(ref4), rtol=1e-5, atol=1e-5)

    # Case 5: global mean with keepdim=True (torch>=2.0: all-size-1 shape).
    y5 = jax.block_until_ready(pallas_mean(x, keepdim=True))
    assert y5.shape == (1, 1, 1, 1)
    np.testing.assert_allclose(np.asarray(y5).ravel()[0], np.asarray(ref3),
                               rtol=1e-5, atol=1e-5)

    # Case 6: odd, non-aligned sizes exercise full-extent (unpadded) blocks.
    xo = jax.random.normal(jax.random.PRNGKey(2), (3, 5, 33), dtype=jnp.float32)
    y6 = jax.block_until_ready(pallas_mean(xo, dim=-1))
    np.testing.assert_allclose(np.asarray(y6), np.asarray(jnp.mean(xo, axis=-1)),
                               rtol=1e-5, atol=1e-5)
    y7 = jax.block_until_ready(pallas_mean(xo, dim=0, keepdim=True))
    np.testing.assert_allclose(np.asarray(y7),
                               np.asarray(jnp.mean(xo, axis=0, keepdims=True)),
                               rtol=1e-5, atol=1e-5)
    y8 = jax.block_until_ready(pallas_mean(xo))
    np.testing.assert_allclose(np.asarray(y8), np.asarray(jnp.mean(xo)),
                               rtol=1e-5, atol=1e-5)

    print("KERNEL_OK")
</pallas_src>

<mosaic_0001>
module attributes {stable_mosaic.version = 11 : i64} {
  func.func @_mean_mid_kernel(%arg0: i32, %arg1: i32, %arg2: i32, %arg3: memref<2x4x256xf32, #tpu.memory_space<vmem>>, %arg4: memref<2x1x256xf32, #tpu.memory_space<vmem>>) attributes {dimension_semantics = [#tpu.dimension_semantics<parallel>, #tpu.dimension_semantics<parallel>, #tpu.dimension_semantics<arbitrary>], iteration_bounds = array<i64: 1, 1, 1>, scalar_prefetch = 0 : i64, scratch_operands = 0 : i64, tpu.core_type = #tpu.core_type<tc>, window_params = [{transform_indices = @transform_0, window_bounds = array<i64: 2, 4, 256>}, {transform_indices = @transform_1, window_bounds = array<i64: 2, 1, 256>}]} {
    %c0 = arith.constant 0 : index
    %c0_0 = arith.constant 0 : index
    %c0_1 = arith.constant 0 : index
    %0 = vector.load %arg3[%c0, %c0_0, %c0_1] : memref<2x4x256xf32, #tpu.memory_space<vmem>>, vector<2x4x256xf32>
    %cst = arith.constant dense<0.000000e+00> : vector<2x256xf32>
    %1 = vector.multi_reduction <add>, %0, %cst [1] : vector<2x4x256xf32> to vector<2x256xf32>
    %2 = vector.shape_cast %1 : vector<2x256xf32> to vector<2x1x256xf32>
    %cst_2 = arith.constant 2.500000e-01 : f32
    %3 = vector.broadcast %cst_2 : f32 to vector<2x1x256xf32>
    %4 = arith.mulf %2, %3 : vector<2x1x256xf32>
    %c0_3 = arith.constant 0 : index
    %c0_4 = arith.constant 0 : index
    %c0_5 = arith.constant 0 : index
    %5 = vector.load %arg4[%c0_3, %c0_4, %c0_5] : memref<2x1x256xf32, #tpu.memory_space<vmem>>, vector<2x1x256xf32>
    tpu.vector_store %arg4[%c0_3, %c0_4, %c0_5], %4 {strides = array<i32>} : memref<2x1x256xf32, #tpu.memory_space<vmem>>, vector<2x1x256xf32>,
    return
  }
  func.func @transform_0(%arg0: i32, %arg1: i32, %arg2: i32) -> (i32, i32, i32) {
    %c0_i32 = arith.constant 0 : i32
    return %arg0, %arg2, %arg1 : i32, i32, i32
  }
  func.func @transform_1(%arg0: i32, %arg1: i32, %arg2: i32) -> (i32, i32, i32) {
    %c0_i32 = arith.constant 0 : i32
    %c0_i32_0 = arith.constant 0 : i32
    return %arg0, %c0_i32, %arg1 : i32, i32, i32
  }
}

</mosaic_0001>

<llo_original>
// kernel: tpu_custom_call.1
$region0: #{tpu_custom_call.1}
  #allocation0 [shape = 'u32[]', space=smem, size = 0x4, offset = 0x4, fixed_abs, tag = 'smem constant byte address 0x4 - core index']
  #allocation1 [shape = 'u32[144,128]{1,0:T(1,128)}', space=vmem, size = 0x12000, scoped, tag = 'internal scratch']
  %s0 = inlined_call_operand.hbm [shape: f32[2,4,256], index: 0, kind: input, shape index: {}]
  %s1 = inlined_call_operand.hbm [shape: f32[2,1,256], index: 1, kind: output, shape index: {}]
  %s2 = sld [smem:[#allocation0]]
  $region18: #{tpu_custom_call.1} parent=0
    _
  %s4 = ssub.s32 1, %s2
  %s5 = scalar_select 0, %s4, %s2
  $region1: #{tpu_custom_call.1} parent=0
    #allocation2 [shape = 'u8[8192]{0}', space=vmem, size = 0x2000, scoped, tag = 'input window, operand 0, single buffered']
    #allocation3 [shape = 's32[1]{0}', space=sflag, size = 0x4, scoped, tag = 'scoped memory for tpu_custom_call.1']
    #allocation4 [shape = 's32[1]{0}', space=sflag, size = 0x4, scoped, tag = 'scoped memory for tpu_custom_call.1']
    #allocation5 [shape = 'u8[2048]{0}', space=vmem, size = 0x800, scoped, tag = 'output window, operand 0, single buffered']
    %6 = vsyncpa [#allocation3], 0
    %7 = vsyncpa [#allocation4], 0
    // Predicated region
    $region2: #{tpu_custom_call.1} parent=1 // pred_check
      _
    $region3: #{tpu_custom_call.1} parent=1 // pred_check_branch
      %9 = sbr.rel (0) target = $region5
    $region4: #{tpu_custom_call.1} parent=1 // pred_region
      %s11 = ssub.s32 256, 256
      %12 = vsyncadd [#allocation3], %s11
      %s13 = sshll.u32 [#allocation2], 4
      %s14 = int_to_ptr.vmem [resolvable:$true] %s13
      %19 = dma.hbm_to_vmem [thread:$0]  %s0, 256, %s14, [#allocation3], 128, 128, 8
    $region5: #{tpu_custom_call.1} parent=1 // pred_fallthru
      _
    // Predicated region
    $region6: #{tpu_custom_call.1} parent=1 // pred_check
      _
    $region7: #{tpu_custom_call.1} parent=1 // pred_check_branch
      %21 = sbr.rel (0) target = $region9
    $region8: #{tpu_custom_call.1} parent=1 // pred_region
      %22 = dma.done [#allocation3], 256
    $region9: #{tpu_custom_call.1} parent=1 // pred_fallthru
      _
    %v23 = vld [vmem:[#allocation2] sm:$0xff]
    %v24 = vld [vmem:[#allocation2 + $0x8] sm:$0xff]
    %v27 = vcombine.high %v23, %v23
    %v28 = vcombine.high %v24, %v24
    %vm31 = vcmask 1043456
    %v32 = vsel %vm31, %v23, 0.0
    %v33 = vrot.slane %v32, 4
    %v34 = vadd.f32 %v32, %v33
    %v35 = vrot.slane %v34, 2
    %v36 = vadd.f32 %v34, %v35
    %v37 = vrot.slane %v36, 1
    %v38 = vadd.f32 %v36, %v37
    %v39 = vsel %vm31, %v27, 0.0
    %v40 = vrot.slane %v39, 4
    %v41 = vadd.f32 %v39, %v40
    %v42 = vrot.slane %v41, 2
    %v43 = vadd.f32 %v41, %v42
    %v44 = vrot.slane %v43, 1
    %v45 = vadd.f32 %v43, %v44
    %v46 = vsel %vm31, %v24, 0.0
    %v47 = vrot.slane %v46, 4
    %v48 = vadd.f32 %v46, %v47
    %v49 = vrot.slane %v48, 2
    %v50 = vadd.f32 %v48, %v49
    %v51 = vrot.slane %v50, 1
    %v52 = vadd.f32 %v50, %v51
    %v53 = vsel %vm31, %v28, 0.0
    %v54 = vrot.slane %v53, 4
    %v55 = vadd.f32 %v53, %v54
    %v56 = vrot.slane %v55, 2
    %v57 = vadd.f32 %v55, %v56
    %v58 = vrot.slane %v57, 1
    %v59 = vadd.f32 %v57, %v58
    %v60 = vmul.f32 %v38, 0.25
    %v61 = vmul.f32 %v45, 0.25
    %v62 = vmul.f32 %v52, 0.25
    %v63 = vmul.f32 %v59, 0.25
    %v68 = vcombine.low %v60, %v61
    %v70 = vunpack.c.l.s4 1966171168
    %v71 = vunpack.c.0.s8 %v70
    %v72 = vlaneseq
    %v73 = vshrl.u32 %v72, 7
    %v74 = vsub.s32 %v71, %v73
    %v75 = vrot.slane %v68, %v74
    %v77 = vunpack.c.l.s4 1966171168
    %v78 = vunpack.c.0.s8 %v77
    %v79 = vlaneseq
    %v80 = vshrl.u32 %v79, 7
    %v81 = vsub.s32 %v78, %v80
    %v82 = vrot.slane %v75, %v81
    %v83 = vcombine.low %v62, %v63
    %v85 = vunpack.c.l.s4 1966171168
    %v86 = vunpack.c.0.s8 %v85
    %v87 = vlaneseq
    %v88 = vshrl.u32 %v87, 7
    %v89 = vsub.s32 %v86, %v88
    %v90 = vrot.slane %v83, %v89
    %v92 = vunpack.c.l.s4 1966171168
    %v93 = vunpack.c.0.s8 %v92
    %v94 = vlaneseq
    %v95 = vshrl.u32 %v94, 7
    %v96 = vsub.s32 %v93, %v95
    %v97 = vrot.slane %v90, %v96
    %v100 = vlaneseq
    %vm101 = vcmp.ge.s32.totalorder %v100, 0
    %vm102 = vcmp.lt.s32.totalorder %v100, 256
    %vm103 = vmand %vm101, %vm102
    %104 = vst.msk [vmem:[#allocation5] sm:$0x3] %vm103, %v82
    %105 = vst.msk [vmem:[#allocation5 + $0x2] sm:$0x3] %vm103, %v97
    // Predicated region
    $region10: #{tpu_custom_call.1} parent=1 // pred_check
      _
    $region11: #{tpu_custom_call.1} parent=1 // pred_check_branch
      %107 = sbr.rel (0) target = $region13
    $region12: #{tpu_custom_call.1} parent=1 // pred_region
      %s109 = ssub.s32 64, 64
      %110 = vsyncadd [#allocation4], %s109
      %s111 = sshll.u32 [#allocation5], 4
      %s112 = int_to_ptr.vmem [resolvable:$true] %s111
      %117 = dma.vmem_to_hbm [thread:$0]  %s112, 64, %s1, [#allocation4], 32, 32, 2
    $region13: #{tpu_custom_call.1} parent=1 // pred_fallthru
      _
    // Predicated region
    $region14: #{tpu_custom_call.1} parent=1 // pred_check
      _
    $region15: #{tpu_custom_call.1} parent=1 // pred_check_branch
      %119 = sbr.rel (0) target = $region17
    $region16: #{tpu_custom_call.1} parent=1 // pred_region
      %120 = dma.done [#allocation4], 64
    $region17: #{tpu_custom_call.1} parent=1 // pred_fallthru
      _
    %121 = vsyncpa [#allocation3], 1
    %122 = vsyncpa [#allocation4], 1

</llo_original>
